<compile_context>
chip_gen: v7x
topology: tpu7x:2x2x1
jax: 0.10.0
libtpu: 0.0.40
codegen_flags: <defaults>
</compile_context>

<pallas_src>
import math

import jax
import jax.numpy as jnp
from jax.experimental import pallas as pl
from jax.experimental.pallas import tpu as pltpu


def _round_up(x: int, m: int) -> int:
    return ((x + m - 1) // m) * m


def _vmem_capacity_bytes() -> int:
    try:
        return int(pltpu.get_tpu_info().vmem_capacity_bytes)
    except Exception:
        return 64 << 20  # conservative fallback (v7x physical VMEM per TC)


def _tiled_bmm(x3, m3, x_batched, m_batched, B, out_dtype, precision):
    """x3:(Bx,M,K) @ m3:(Bm,K,N) -> (B,M,N); Bx/Bm are B or 1 (broadcast)."""
    _, M, K = x3.shape
    _, _, N = m3.shape

    x_item = jnp.dtype(x3.dtype).itemsize
    m_item = jnp.dtype(m3.dtype).itemsize
    out_item = jnp.dtype(out_dtype).itemsize
    compute_dtype = jnp.dtype(out_dtype)
    out_is_f32 = compute_dtype == jnp.dtype(jnp.float32)

    # --- alignment / padding targets -------------------------------------
    #   x:(B,M,K) -> M sublane, K lane ; m:(B,K,N) -> K sublane, N lane ;
    #   out:(B,M,N) -> M sublane, N lane (lane-dense output => N mult of 128).
    Mp = _round_up(M, 8)
    Kp = _round_up(K, 128)
    Np = _round_up(N, 128)

    capacity = _vmem_capacity_bytes()
    big_vmem = capacity >= (100 << 20)       # v5e/v6e: 128 MiB; v7x: 64 MiB
    max_item = max(x_item, m_item)

    if big_vmem:
        # 128-MiB parts: ~16 MiB resident at f32 with these tiles (explicit
        # vmem_limit below covers v5e's 16-MiB scoped default).
        tm_max, tn_max, tk_max = 512, 1024, 1024
    elif max_item <= 2:
        # bf16/fp8 on 64-MiB parts: deeper K is cheap.
        tm_max, tn_max, tk_max = 512, 512, 1024
    else:
        # f32 on v7x: ~7 MiB resident — well under the 32-MiB scoped default.
        tm_max, tn_max, tk_max = 512, 512, 512

    tm = min(Mp, tm_max)
    tn = min(Np, tn_max)
    tk = min(Kp, tk_max)
    Mp = _round_up(Mp, tm)
    Np = _round_up(Np, tn)
    Kp = _round_up(Kp, tk)
    n_k = Kp // tk

    # --- batch blocking ----------------------------------------------------
    # If the whole per-batch matmul is a single tile, process several batch
    # elements per grid step (amortizes ~0.35us/step), but keep at least two
    # parallel grid steps so both TensorCores get work on v7x.
    bt = 1
    if B > 1 and Mp == tm and Np == tn and Kp == tk:
        per_elem = 2 * (tm * tk * x_item + tk * tn * m_item + tm * tn * out_item)
        vmem_cap_bt = max(1, (16 << 20) // max(per_elem, 1))
        cap = int(min(8, vmem_cap_bt, max(1, B // 2)))
        bt = max((d for d in range(1, cap + 1) if B % d == 0), default=1)

    # --- host-side zero padding --------------------------------------------
    # K padding is required for correctness (garbage in the contracting dim
    # would corrupt results); M/N padding keeps blocks aligned / lane-dense.
    # TODO(synk): handle the K remainder with in-kernel masking to avoid the
    # extra HBM pass for very large, misaligned operands.
    if (Mp, Kp) != (M, K):
        x3 = jnp.pad(x3, ((0, 0), (0, Mp - M), (0, Kp - K)))
    if (Kp, Np) != (K, N):
        m3 = jnp.pad(m3, ((0, 0), (0, Kp - K), (0, Np - N)))

    grid = (B // bt, Mp // tm, Np // tn, n_k)

    # --- block specs ---------------------------------------------------------
    if bt == 1:
        x_bdim = pl.Squeezed()
        m_bdim = pl.Squeezed()
        o_bdim = pl.Squeezed()
    else:
        x_bdim = bt if x_batched else pl.Squeezed()
        m_bdim = bt if m_batched else pl.Squeezed()
        o_bdim = bt

    x_map = (lambda b, i, j, k: (b, i, k)) if x_batched else (lambda b, i, j, k: (0, i, k))
    m_map = (lambda b, i, j, k: (b, k, j)) if m_batched else (lambda b, i, j, k: (0, k, j))
    o_map = lambda b, i, j, k: (b, i, j)

    # --- kernel bodies -------------------------------------------------------
    def _dot2d(a, b):
        if a.dtype != compute_dtype:
            a = a.astype(compute_dtype)
        if b.dtype != compute_dtype:
            b = b.astype(compute_dtype)
        return jnp.dot(a, b, preferred_element_type=jnp.float32,
                       precision=precision)

    scratch_shapes = []
    if n_k == 1:
        # Single K step: no accumulator needed at all.
        if bt == 1:
            def kernel(a_ref, b_ref, o_ref):
                o_ref[...] = _dot2d(a_ref[...], b_ref[...]).astype(o_ref.dtype)
        else:
            def kernel(a_ref, b_ref, o_ref):
                for bb in range(bt):
                    a = a_ref[bb] if x_batched else a_ref[...]
                    b = b_ref[bb] if m_batched else b_ref[...]
                    o_ref[bb] = _dot2d(a, b).astype(o_ref.dtype)
    elif out_is_f32:
        # Multi-K, f32 output: accumulate directly into the resident output
        # block (index_map ignores k), no scratch, no zero-init store.
        def kernel(a_ref, b_ref, o_ref):
            part = _dot2d(a_ref[...], b_ref[...])
            k = pl.program_id(3)

            @pl.when(k == 0)
            def _first():
                o_ref[...] = part

            @pl.when(k > 0)
            def _rest():
                o_ref[...] += part
    else:
        # Multi-K, non-f32 output: f32 VMEM accumulator with init/finalize.
        def kernel(a_ref, b_ref, o_ref, acc_ref):
            @pl.when(pl.program_id(3) == 0)
            def _init():
                acc_ref[...] = jnp.zeros_like(acc_ref)

            acc_ref[...] += _dot2d(a_ref[...], b_ref[...])

            @pl.when(pl.program_id(3) == pl.num_programs(3) - 1)
            def _store():
                o_ref[...] = acc_ref[...].astype(o_ref.dtype)

        scratch_shapes = [pltpu.VMEM((tm, tn), jnp.float32)]

    # --- VMEM budget & cost estimate ----------------------------------------
    a_block = (bt if x_batched else 1) * tm * tk
    b_block = (bt if m_batched else 1) * tk * tn
    o_block = bt * tm * tn
    resident = 2 * (a_block * x_item + b_block * m_item + o_block * out_item)
    if scratch_shapes:
        resident += tm * tn * 4
    vmem_limit = int(min(capacity * 3 // 4,
                         max(32 << 20, resident + (16 << 20))))

    pass_factor = 1
    if compute_dtype == jnp.dtype(jnp.float32):
        if precision == jax.lax.Precision.HIGHEST:
            pass_factor = 6
        elif precision == jax.lax.Precision.HIGH:
            pass_factor = 3
    n_steps = grid[0] * grid[1] * grid[2] * grid[3]
    cost = pl.CostEstimate(
        flops=2 * B * Mp * Kp * Np * pass_factor,
        transcendentals=0,
        bytes_accessed=n_steps * (a_block * x_item + b_block * m_item)
        + grid[0] * grid[1] * grid[2] * o_block * out_item,
    )

    out_padded = pl.pallas_call(
        kernel,
        out_shape=jax.ShapeDtypeStruct((B, Mp, Np), out_dtype),
        grid_spec=pltpu.PrefetchScalarGridSpec(
            num_scalar_prefetch=0,
            grid=grid,
            in_specs=[
                pl.BlockSpec((x_bdim, tm, tk), x_map),
                pl.BlockSpec((m_bdim, tk, tn), m_map),
            ],
            out_specs=pl.BlockSpec((o_bdim, tm, tn), o_map),
            scratch_shapes=scratch_shapes,
        ),
        compiler_params=pltpu.CompilerParams(
            dimension_semantics=("parallel", "parallel", "parallel", "arbitrary"),
            vmem_limit_bytes=vmem_limit,
        ),
        cost_estimate=cost,
    )(x3, m3)

    return out_padded[:, :M, :N]


def act_act_matmul(x, m, *, precision=None):
    """ActActMatMul.forward: matmul of two activations (dmx casts are identity)."""
    x = jnp.asarray(x)
    m = jnp.asarray(m)
    assert x.ndim >= 2 and m.ndim >= 2, "operands must be at least 2-D"
    # TODO(synk): torch.matmul's 1-D operand (vector) broadcasting is not handled.

    M, K = x.shape[-2:]
    K2, N = m.shape[-2:]
    assert K == K2, f"contracting dims differ: {K} vs {K2}"

    out_dtype = jnp.result_type(x.dtype, m.dtype)
    if precision is None:
        # torch.matmul on fp32 is a true fp32 matmul; DEFAULT on the MXU would
        # use single-pass bf16, so request HIGHEST for fp32 results.
        precision = (jax.lax.Precision.HIGHEST
                     if jnp.dtype(out_dtype) == jnp.dtype(jnp.float32)
                     else jax.lax.Precision.DEFAULT)
    else:
        precision = jax.lax.Precision(precision)

    x_lead = x.shape[:-2]
    m_lead = m.shape[:-2]
    batch_shape = jnp.broadcast_shapes(x_lead, m_lead)
    B = int(math.prod(batch_shape)) if batch_shape else 1
    if B == 0:
        return jnp.zeros(batch_shape + (M, N), out_dtype)

    def _prep(a, lead, mat_shape):
        """Flatten to 3-D without materializing broadcast batch dims."""
        lead_size = math.prod(lead) if lead else 1
        if lead_size == 1:
            return a.reshape((1,) + mat_shape), False
        if tuple(lead) == tuple(batch_shape):
            return a.reshape((B,) + mat_shape), True
        # Partial broadcast (e.g. (G,1,M,K) vs (G,H,K,N)): materialize.
        # TODO(synk): express partial leading-dim broadcast via index_map
        # arithmetic instead of materializing the broadcast in HBM.
        a = jnp.broadcast_to(a, batch_shape + mat_shape)
        return a.reshape((B,) + mat_shape), True

    x3, x_batched = _prep(x, x_lead, (M, K))
    m3, m_batched = _prep(m, m_lead, (K, N))

    out3 = _tiled_bmm(x3, m3, x_batched, m_batched, B, out_dtype, precision)
    return out3.reshape(batch_shape + (M, N))


if __name__ == "__main__":
    key = jax.random.PRNGKey(0)
    k1, k2, k3, k4, k5, k6 = jax.random.split(key, 6)
    HI = jax.lax.Precision.HIGHEST

    # 1) Small batched matmul consistent with the module (batch=2, seq=8,
    #    hidden=32, N=16): padded / lane-dense, single-K-step direct-write path.
    B, M, K, N = 2, 8, 32, 16
    x = jax.random.normal(k1, (B, M, K), dtype=jnp.float32)
    mult = jax.random.normal(k2, (B, K, N), dtype=jnp.float32)
    out = jax.block_until_ready(act_act_matmul(x, mult))
    ref = jnp.einsum("bmk,bkn->bmn", x, mult, precision=HI)
    assert out.shape == ref.shape and out.dtype == ref.dtype
    assert jnp.allclose(out, ref, atol=1e-4, rtol=1e-5), float(
        jnp.max(jnp.abs(out - ref)))

    # 2) Shared 2-D multiplier (torch.matmul broadcast): the multiplier is NOT
    #    materialized per batch; its index_map ignores the batch grid index.
    m_shared = jax.random.normal(k3, (K, N), dtype=jnp.float32)
    out_b = jax.block_until_ready(act_act_matmul(x, m_shared))
    ref_b = jnp.einsum("bmk,kn->bmn", x, m_shared, precision=HI)
    assert jnp.allclose(out_b, ref_b, atol=1e-4, rtol=1e-5)

    # 3) Batch-blocked tiny-matmul path (bt > 1, both TCs still busy).
    x4 = jax.random.normal(k4, (4, M, K), dtype=jnp.float32)
    m4 = jax.random.normal(k5, (4, K, N), dtype=jnp.float32)
    out4 = jax.block_until_ready(act_act_matmul(x4, m4))
    ref4 = jnp.einsum("bmk,bkn->bmn", x4, m4, precision=HI)
    assert jnp.allclose(out4, ref4, atol=1e-4, rtol=1e-5)

    # 4) Larger shape: multi-K-step accumulation directly into the f32 output.
    B2, M2, K2n, N2 = 2, 256, 2048, 256
    x2 = jax.random.normal(k6, (B2, M2, K2n), dtype=jnp.float32)
    mult2 = jax.random.normal(k1, (B2, K2n, N2), dtype=jnp.float32)
    out2 = jax.block_until_ready(act_act_matmul(x2, mult2))
    ref2 = jnp.einsum("bmk,bkn->bmn", x2, mult2, precision=HI)
    assert jnp.allclose(out2, ref2, atol=1e-3, rtol=1e-4), float(
        jnp.max(jnp.abs(out2 - ref2)))

    # 5) bf16 multi-K-step path (f32 scratch accumulator, bf16 store).
    xb = x2.astype(jnp.bfloat16)
    mb = mult2.astype(jnp.bfloat16)
    out_bf = jax.block_until_ready(act_act_matmul(xb, mb))
    ref_bf = jnp.matmul(xb, mb)  # XLA bf16 matmul, f32 accumulation
    assert out_bf.dtype == jnp.bfloat16
    assert jnp.allclose(out_bf.astype(jnp.float32), ref_bf.astype(jnp.float32),
                        atol=0.5, rtol=2e-2)

    print("KERNEL_OK")
</pallas_src>

<mosaic_0001>
module attributes {stable_mosaic.version = 11 : i64} {
  func.func @kernel(%arg0: i32, %arg1: i32, %arg2: i32, %arg3: i32, %arg4: memref<1x8x128xf32, #tpu.memory_space<vmem>>, %arg5: memref<1x128x128xf32, #tpu.memory_space<vmem>>, %arg6: memref<1x8x128xf32, #tpu.memory_space<vmem>>) attributes {dimension_semantics = [#tpu.dimension_semantics<parallel>, #tpu.dimension_semantics<parallel>, #tpu.dimension_semantics<parallel>, #tpu.dimension_semantics<arbitrary>], iteration_bounds = array<i64: 2, 1, 1, 1>, scalar_prefetch = 0 : i64, scratch_operands = 0 : i64, tpu.core_type = #tpu.core_type<tc>, window_params = [{transform_indices = @transform_0, window_bounds = array<i64: 1, 8, 128>}, {transform_indices = @transform_1, window_bounds = array<i64: 1, 128, 128>}, {transform_indices = @transform_2, window_bounds = array<i64: 1, 8, 128>}]} {
    %c0 = arith.constant 0 : index
    %c0_0 = arith.constant 0 : index
    %c0_1 = arith.constant 0 : index
    %0 = vector.load %arg4[%c0, %c0_0, %c0_1] : memref<1x8x128xf32, #tpu.memory_space<vmem>>, vector<1x8x128xf32>
    %1 = vector.shape_cast %0 : vector<1x8x128xf32> to vector<8x128xf32>
    %c0_2 = arith.constant 0 : index
    %c0_3 = arith.constant 0 : index
    %c0_4 = arith.constant 0 : index
    %2 = vector.load %arg5[%c0_2, %c0_3, %c0_4] : memref<1x128x128xf32, #tpu.memory_space<vmem>>, vector<1x128x128xf32>
    %3 = vector.shape_cast %2 : vector<1x128x128xf32> to vector<128x128xf32>
    %cst = arith.constant dense<0.000000e+00> : vector<8x128xf32>
    %4 = tpu.matmul %1, %3, %cst {dimension_numbers = #tpu.dot_dimension_numbers<[1], [0], [0], [1], [0, 0, 1, 1], [], []>, precision = #tpu.contract_precision<fp32>} : vector<8x128xf32>, vector<128x128xf32>, vector<8x128xf32> -> vector<8x128xf32>
    %c0_5 = arith.constant 0 : index
    %c0_6 = arith.constant 0 : index
    %c0_7 = arith.constant 0 : index
    %5 = vector.load %arg6[%c0_5, %c0_6, %c0_7] : memref<1x8x128xf32, #tpu.memory_space<vmem>>, vector<1x8x128xf32>
    %6 = vector.shape_cast %5 : vector<1x8x128xf32> to vector<8x128xf32>
    %7 = vector.shape_cast %4 : vector<8x128xf32> to vector<1x8x128xf32>
    tpu.vector_store %arg6[%c0_5, %c0_6, %c0_7], %7 {strides = array<i32>} : memref<1x8x128xf32, #tpu.memory_space<vmem>>, vector<1x8x128xf32>,
    return
  }
  func.func @transform_0(%arg0: i32, %arg1: i32, %arg2: i32, %arg3: i32) -> (i32, i32, i32) {
    %c0_i32 = arith.constant 0 : i32
    return %arg0, %arg1, %arg3 : i32, i32, i32
  }
  func.func @transform_1(%arg0: i32, %arg1: i32, %arg2: i32, %arg3: i32) -> (i32, i32, i32) {
    %c0_i32 = arith.constant 0 : i32
    return %arg0, %arg3, %arg2 : i32, i32, i32
  }
  func.func @transform_2(%arg0: i32, %arg1: i32, %arg2: i32, %arg3: i32) -> (i32, i32, i32) {
    %c0_i32 = arith.constant 0 : i32
    return %arg0, %arg1, %arg2 : i32, i32, i32
  }
}

</mosaic_0001>

<llo_original>
// kernel: tpu_custom_call.1
$region0: #{tpu_custom_call.1}
  #allocation0 [shape = 'u32[]', space=smem, size = 0x4, offset = 0x4, fixed_abs, tag = 'smem constant byte address 0x4 - core index']
  #allocation1 [shape = 'u32[144,128]{1,0:T(1,128)}', space=vmem, size = 0x12000, scoped, tag = 'internal scratch']
  %s0 = inlined_call_operand.hbm [shape: f32[2,8,128], index: 0, kind: input, shape index: {}]
  %s1 = inlined_call_operand.hbm [shape: f32[2,128,128], index: 1, kind: input, shape index: {}]
  %s2 = inlined_call_operand.hbm [shape: f32[2,8,128], index: 2, kind: output, shape index: {}]
  %s3 = sld [smem:[#allocation0]]
  $region49: #{tpu_custom_call.1} parent=0
    _
  %s5 = ssub.s32 1, %s3
  %s6 = scalar_select 0, %s5, %s3
  $region1: #{tpu_custom_call.1} parent=0
    #allocation2 [shape = 'u8[8192]{0}', space=vmem, size = 0x2000, scoped, tag = 'input window, operand 0']
    #allocation3 [shape = 's32[2]{0}', space=sflag, size = 0x8, scoped, tag = 'scoped memory for tpu_custom_call.1']
    #allocation4 [shape = 's32[2]{0}', space=sflag, size = 0x8, scoped, tag = 'scoped memory for tpu_custom_call.1']
    #allocation5 [shape = 'u8[131072]{0}', space=vmem, size = 0x20000, scoped, tag = 'input window, operand 1']
    #allocation6 [shape = 's32[2]{0}', space=sflag, size = 0x8, scoped, tag = 'scoped memory for tpu_custom_call.1']
    #allocation7 [shape = 'u8[8192]{0}', space=vmem, size = 0x2000, scoped, tag = 'output window, operand 0']
    %7 = vsyncpa [#allocation3], 0
    %s8 = scalar_lea.sflag [#allocation3], 1
    %9 = vsyncpa %s8, 0
    %10 = vsyncpa [#allocation6], 0
    %s11 = scalar_lea.sflag [#allocation6], 1
    %12 = vsyncpa %s11, 0
    %13 = vsyncpa [#allocation4], 0
    %s14 = scalar_lea.sflag [#allocation4], 1
    %15 = vsyncpa %s14, 0
    loop: start=0, step=1, limit=4
    $region2: #{tpu_custom_call.1} parent=1 // loop_pre_header
      _
    $region3: #{tpu_custom_call.1} parent=1 // loop_header
      %s17 = sphi 0, %s21
      %p18 = scmp.ge.s32.totalorder %s17, 4
      %s24 = sphi 0, %s50
      %s25 = sphi 0, %s46
      %s26 = sphi 0, %s42
      %s27 = sphi 0, %s38
      %s28 = sphi 0, %s24
      %s29 = sphi 0, %s25
      %s30 = sphi 0, %s26
      %s31 = sphi 0, %s27
      %s32 = sphi 0, %s28
      %s33 = sphi 0, %s29
      %s34 = sphi 0, %s30
      %s35 = sphi 0, %s31
      %s57 = sphi 0, %s59
      %s60 = sphi 0, %s57
      %s61 = sphi 0, %s60
      %s77 = sphi 0, %s61
      %s87 = sphi 0, %s89
      %s90 = sphi 0, %s87
      %s91 = sphi 0, %s90
      %s107 = sphi 0, %s91
      %s117 = sphi 0, %s119
      %s120 = sphi 0, %s117
      %s121 = sphi 0, %s120
      %s137 = sphi 0, %s121
    $region4: #{tpu_custom_call.1} parent=1 // loop_header_branch
      %20 = sbr.rel (%p18) target = $region8
    $region5: #{tpu_custom_call.1} parent=1 // loop_body
      %s22 = ssub.s32 %s17, 1
      %s23 = ssub.s32 %s17, 2
      %s36 = sadd.s32 1, %s27
      %p37 = scmp.ge.s32.totalorder %s36, 1
      %s38 = scalar_select %p37, 0, %s36
      %s39 = sadd.s32 1, %s26
      %s40 = scalar_select %p37, %s39, %s26
      %p41 = scmp.ge.s32.totalorder %s40, 1
      %s42 = scalar_select %p41, 0, %s40
      %s43 = sadd.s32 1, %s25
      %s44 = scalar_select %p41, %s43, %s25
      %p45 = scmp.ge.s32.totalorder %s44, 1
      %s46 = scalar_select %p45, 0, %s44
      %s47 = sadd.s32 1, %s24
      %s48 = scalar_select %p45, %s47, %s24
      %p49 = scmp.ge.s32.totalorder %s48, 2
      %s50 = scalar_select %p49, 0, %s48
      %s51 = ssub.s32 %s24, %s50
      %s52 = ssub.s32 %s25, %s46
      %s53 = sor.u32 %s51, %s52
      %s54 = ssub.s32 %s27, %s38
      %s55 = sor.u32 %s53, %s54
      %p56 = scmp.eq.s32.totalorder %s55, 0
      %s58 = sadd.s32 %s57, 1
      %s59 = scalar_select %p56, %s57, %s58
      %p62 = pneg %p56
      %p63 = scmp.eq.s32.totalorder %s17, 1
      %p64 = por %p62, %p63
      %p65 = scmp.ne.s32.totalorder %s57, %s60
      %p66 = scmp.eq.s32.totalorder %s17, 0
      %p67 = por %p65, %p66
      %p68 = scmp.ne.s32.totalorder %s57, %s60
      %p69 = scmp.eq.s32.totalorder %s22, 1
      %p70 = por %p68, %p69
      %p71 = scmp.ne.s32.totalorder %s60, %s61
      %p72 = scmp.eq.s32.totalorder %s22, 0
      %p73 = por %p71, %p72
      %p74 = scmp.ne.s32.totalorder %s60, %s61
      %p75 = scmp.eq.s32.totalorder %s23, 1
      %p76 = por %p74, %p75
      %p78 = scmp.ne.s32.totalorder %s61, %s77
      %p79 = scmp.eq.s32.totalorder %s23, 0
      %p80 = por %p78, %p79
      %s81 = ssub.s32 %s24, %s50
      %s82 = ssub.s32 %s27, %s38
      %s83 = sor.u32 %s81, %s82
      %s84 = ssub.s32 %s26, %s42
      %s85 = sor.u32 %s83, %s84
      %p86 = scmp.eq.s32.totalorder %s85, 0
      %s88 = sadd.s32 %s87, 1
      %s89 = scalar_select %p86, %s87, %s88
      %p92 = pneg %p86
      %p93 = scmp.eq.s32.totalorder %s17, 1
      %p94 = por %p92, %p93
      %p95 = scmp.ne.s32.totalorder %s87, %s90
      %p96 = scmp.eq.s32.totalorder %s17, 0
      %p97 = por %p95, %p96
      %p98 = scmp.ne.s32.totalorder %s87, %s90
      %p99 = scmp.eq.s32.totalorder %s22, 1
      %p100 = por %p98, %p99
      %p101 = scmp.ne.s32.totalorder %s90, %s91
      %p102 = scmp.eq.s32.totalorder %s22, 0
      %p103 = por %p101, %p102
      %p104 = scmp.ne.s32.totalorder %s90, %s91
      %p105 = scmp.eq.s32.totalorder %s23, 1
      %p106 = por %p104, %p105
      %p108 = scmp.ne.s32.totalorder %s91, %s107
      %p109 = scmp.eq.s32.totalorder %s23, 0
      %p110 = por %p108, %p109
      %s111 = ssub.s32 %s24, %s50
      %s112 = ssub.s32 %s25, %s46
      %s113 = sor.u32 %s111, %s112
      %s114 = ssub.s32 %s26, %s42
      %s115 = sor.u32 %s113, %s114
      %p116 = scmp.eq.s32.totalorder %s115, 0
      %s118 = sadd.s32 %s117, 1
      %s119 = scalar_select %p116, %s117, %s118
      %p122 = pneg %p116
      %p123 = scmp.eq.s32.totalorder %s17, 1
      %p124 = por %p122, %p123
      %p125 = scmp.ne.s32.totalorder %s117, %s120
      %p126 = scmp.eq.s32.totalorder %s17, 0
      %p127 = por %p125, %p126
      %p128 = scmp.ne.s32.totalorder %s117, %s120
      %p129 = scmp.eq.s32.totalorder %s22, 1
      %p130 = por %p128, %p129
      %p131 = scmp.ne.s32.totalorder %s120, %s121
      %p132 = scmp.eq.s32.totalorder %s22, 0
      %p133 = por %p131, %p132
      %p134 = scmp.ne.s32.totalorder %s120, %s121
      %p135 = scmp.eq.s32.totalorder %s23, 1
      %p136 = por %p134, %p135
      %p138 = scmp.ne.s32.totalorder %s121, %s137
      %p139 = scmp.eq.s32.totalorder %s23, 0
      %p140 = por %p138, %p139
      %p141 = scmp.le.s32.totalorder 1, %s17
      %p142 = scmp.lt.s32.totalorder %s17, 3
      %p143 = pnand %p141, %p142
      %p144 = pneg %p143
      // Predicated region
      $region9: #{tpu_custom_call.1} parent=5 // pred_check
        _
      $region10: #{tpu_custom_call.1} parent=5 // pred_check_branch
        %146 = sbr.rel (%p143) target = $region12
      $region11: #{tpu_custom_call.1} parent=5 // pred_region
        %s147 = ssub.s32 %s17, 1
      $region12: #{tpu_custom_call.1} parent=5 // pred_fallthru
        _
      %p148 = scmp.lt.s32.totalorder %s17, 2
      // Predicated region
      $region13: #{tpu_custom_call.1} parent=5 // pred_check
        %p149 = pneg %p148
      $region14: #{tpu_custom_call.1} parent=5 // pred_check_branch
        %151 = sbr.rel (%p149) target = $region16
      $region15: #{tpu_custom_call.1} parent=5 // pred_region
        // Predicated region
        $region17: #{tpu_custom_call.1} parent=15 // pred_check
          %p152 = pneg %p67
        $region18: #{tpu_custom_call.1} parent=15 // pred_check_branch
          %154 = sbr.rel (%p152) target = $region20
        $region19: #{tpu_custom_call.1} parent=15 // pred_region
          %s155 = sand.u32 %s57, 1
          %s156 = scalar_lea.sflag [#allocation3], %s155
          %s157 = sand.u32 %s57, 1
          %s158 = smul.addr %s157, 8
          %s159 = scalar_lea.vmem [#allocation2], %s158
          %s161 = ssub.s32 128, 128
          %162 = vsyncadd %s156, %s161
          %s163 = sadd.s32 %s27, %s25
          %s164 = sadd.s32 %s163, %s24
          %s165 = smul.addr %s164, 128
          %s166 = scalar_lea.hbm %s0, %s165
          %s168 = sshll.u32 %s159, 4
          %s169 = int_to_ptr.vmem [resolvable:$true] %s168
          %171 = dma.hbm_to_vmem [thread:$0]  %s166, 128, %s169, %s156
        $region20: #{tpu_custom_call.1} parent=15 // pred_fallthru
          _
        // Predicated region
        $region21: #{tpu_custom_call.1} parent=15 // pred_check
          %p172 = pneg %p97
        $region22: #{tpu_custom_call.1} parent=15 // pred_check_branch
          %174 = sbr.rel (%p172) target = $region24
        $region23: #{tpu_custom_call.1} parent=15 // pred_region
          %s175 = sand.u32 %s87, 1
          %s176 = scalar_lea.sflag [#allocation6], %s175
          %s177 = sand.u32 %s87, 1
          %s178 = smul.addr %s177, 128
          %s179 = scalar_lea.vmem [#allocation5], %s178
          %s180 = smul.u32 16, %s27
          %s182 = ssub.s32 2048, 2048
          %183 = vsyncadd %s176, %s182
          %s184 = sadd.s32 %s26, %s180
          %s185 = smul.addr %s24, 16
          %s186 = sadd.s32 %s184, %s185
          %s187 = smul.addr %s186, 128
          %s188 = scalar_lea.hbm %s1, %s187
          %s189 = sshll.u32 %s179, 4
          %s190 = int_to_ptr.vmem [resolvable:$true] %s189
          %195 = dma.hbm_to_vmem [thread:$0]  %s188, 2048, %s190, %s176, 128, 128, 8
        $region24: #{tpu_custom_call.1} parent=15 // pred_fallthru
          _
      $region16: #{tpu_custom_call.1} parent=5 // pred_fallthru
        _
      %p196 = scmp.le.s32.totalorder 1, %s17
      %p197 = scmp.lt.s32.totalorder %s17, 3
      %p198 = pnand %p196, %p197
      %p199 = pneg %p198
      // Predicated region
      $region25: #{tpu_custom_call.1} parent=5 // pred_check
        _
      $region26: #{tpu_custom_call.1} parent=5 // pred_check_branch
        %201 = sbr.rel (%p198) target = $region28
      $region27: #{tpu_custom_call.1} parent=5 // pred_region
        %s202 = ssub.s32 %s17, 1
        %s203 = sand.u32 %s60, 1
        %s204 = scalar_lea.sflag [#allocation3], %s203
        %s205 = sand.u32 %s60, 1
        %s206 = smul.addr %s205, 8
        %s207 = scalar_lea.vmem [#allocation2], %s206
        // Predicated region
        $region29: #{tpu_custom_call.1} parent=27 // pred_check
          %p208 = pneg %p73
        $region30: #{tpu_custom_call.1} parent=27 // pred_check_branch
          %210 = sbr.rel (%p208) target = $region32
        $region31: #{tpu_custom_call.1} parent=27 // pred_region
          %211 = dma.done %s204, 128
        $region32: #{tpu_custom_call.1} parent=27 // pred_fallthru
          _
        %s212 = sand.u32 %s90, 1
        %s213 = scalar_lea.sflag [#allocation6], %s212
        %s214 = sand.u32 %s90, 1
        %s215 = smul.addr %s214, 128
        %s216 = scalar_lea.vmem [#allocation5], %s215
        // Predicated region
        $region33: #{tpu_custom_call.1} parent=27 // pred_check
          %p217 = pneg %p103
        $region34: #{tpu_custom_call.1} parent=27 // pred_check_branch
          %219 = sbr.rel (%p217) target = $region36
        $region35: #{tpu_custom_call.1} parent=27 // pred_region
          %220 = dma.done %s213, 2048
        $region36: #{tpu_custom_call.1} parent=27 // pred_fallthru
          _
        %s221 = sand.u32 %s60, 1
        %s222 = scalar_lea.sflag [#allocation3], %s221
        %s223 = sand.u32 %s60, 1
        %s224 = smul.addr %s223, 8
        %s225 = scalar_lea.vmem [#allocation2], %s224
        %p226 = pneg %p73
        %p227 = pneg %p70
        %s228 = sand.u32 %s90, 1
        %s229 = scalar_lea.sflag [#allocation6], %s228
        %s230 = sand.u32 %s90, 1
        %s231 = smul.addr %s230, 128
        %s232 = scalar_lea.vmem [#allocation5], %s231
        %p233 = pneg %p103
        %p234 = pneg %p100
        %p235 = pneg %p133
        %p236 = pneg %p130
        %s237 = sand.u32 %s120, 1
        %s238 = scalar_lea.sflag [#allocation4], %s237
        %s239 = sand.u32 %s120, 1
        %s240 = smul.addr %s239, 8
        %s241 = scalar_lea.vmem [#allocation7], %s240
        %s242 = smul.u32 16, %s31
        %v243 = vld [vmem:[%s207] sm:$0xff]
        %v244 = vld [vmem:[%s216] sm:$0xff]
        %v245 = vld [vmem:[%s216 + $0x8] sm:$0xff]
        %v246 = vld [vmem:[%s216 + $0x10] sm:$0xff]
        %v247 = vld [vmem:[%s216 + $0x18] sm:$0xff]
        %v248 = vld [vmem:[%s216 + $0x20] sm:$0xff]
        %v249 = vld [vmem:[%s216 + $0x28] sm:$0xff]
        %v250 = vld [vmem:[%s216 + $0x30] sm:$0xff]
        %v251 = vld [vmem:[%s216 + $0x38] sm:$0xff]
        %v252 = vld [vmem:[%s216 + $0x40] sm:$0xff]
        %v253 = vld [vmem:[%s216 + $0x48] sm:$0xff]
        %v254 = vld [vmem:[%s216 + $0x50] sm:$0xff]
        %v255 = vld [vmem:[%s216 + $0x58] sm:$0xff]
        %v256 = vld [vmem:[%s216 + $0x60] sm:$0xff]
        %v257 = vld [vmem:[%s216 + $0x68] sm:$0xff]
        %v258 = vld [vmem:[%s216 + $0x70] sm:$0xff]
        %v259 = vld [vmem:[%s216 + $0x78] sm:$0xff]
        %260 = vmatprep.subr.mxu0 0.0
        %v261 = vand.u32 %v244, 4294901760
        %262 = vmatpush1.msra.mxu0 %v261
        %263 = vmatprep.subr.mxu0 0.0
        %v264 = vand.u32 %v245, 4294901760
        %265 = vmatpush1.msra.mxu0 %v264
        %266 = vmatprep.subr.mxu0 0.0
        %v267 = vand.u32 %v246, 4294901760
        %268 = vmatpush1.msra.mxu0 %v267
        %269 = vmatprep.subr.mxu0 0.0
        %v270 = vand.u32 %v247, 4294901760
        %271 = vmatpush1.msra.mxu0 %v270
        %272 = vmatprep.subr.mxu0 0.0
        %v273 = vand.u32 %v248, 4294901760
        %274 = vmatpush1.msra.mxu0 %v273
        %275 = vmatprep.subr.mxu0 0.0
        %v276 = vand.u32 %v249, 4294901760
        %277 = vmatpush1.msra.mxu0 %v276
        %278 = vmatprep.subr.mxu0 0.0
        %v279 = vand.u32 %v250, 4294901760
        %280 = vmatpush1.msra.mxu0 %v279
        %281 = vmatprep.subr.mxu0 0.0
        %v282 = vand.u32 %v251, 4294901760
        %283 = vmatpush1.msra.mxu0 %v282
        %284 = vmatprep.subr.mxu0 0.0
        %v285 = vand.u32 %v252, 4294901760
        %286 = vmatpush1.msra.mxu0 %v285
        %287 = vmatprep.subr.mxu0 0.0
        %v288 = vand.u32 %v253, 4294901760
        %289 = vmatpush1.msra.mxu0 %v288
        %290 = vmatprep.subr.mxu0 0.0
        %v291 = vand.u32 %v254, 4294901760
        %292 = vmatpush1.msra.mxu0 %v291
        %293 = vmatprep.subr.mxu0 0.0
        %v294 = vand.u32 %v255, 4294901760
        %295 = vmatpush1.msra.mxu0 %v294
        %296 = vmatprep.subr.mxu0 0.0
        %v297 = vand.u32 %v256, 4294901760
        %298 = vmatpush1.msra.mxu0 %v297
        %299 = vmatprep.subr.mxu0 0.0
        %v300 = vand.u32 %v257, 4294901760
        %301 = vmatpush1.msra.mxu0 %v300
        %302 = vmatprep.subr.mxu0 0.0
        %v303 = vand.u32 %v258, 4294901760
        %304 = vmatpush1.msra.mxu0 %v303
        %305 = vmatprep.subr.mxu0 0.0
        %v306 = vand.u32 %v259, 4294901760
        %307 = vmatpush1.msra.mxu0 %v306
        %308 = vmatprep.subr.mxu0 0.0
        %309 = vmatpush1.msra.mxu0 0.0
        %310 = vmatprep.subr.mxu0 0.0
        %311 = vmatpush1.msra.mxu0 0.0
        %312 = vmatprep.subr.mxu0 0.0
        %313 = vmatpush1.msra.mxu0 0.0
        %314 = vmatprep.subr.mxu0 0.0
        %315 = vmatpush1.msra.mxu0 0.0
        %316 = vmatprep.subr.mxu0 0.0
        %317 = vmatpush1.msra.mxu0 0.0
        %318 = vmatprep.subr.mxu0 0.0
        %319 = vmatpush1.msra.mxu0 0.0
        %320 = vmatprep.subr.mxu0 0.0
        %321 = vmatpush1.msra.mxu0 0.0
        %322 = vmatprep.subr.mxu0 0.0
        %323 = vmatpush1.msra.mxu0 0.0
        %324 = vmatprep.subr.mxu0 0.0
        %325 = vmatpush1.msra.mxu0 0.0
        %326 = vmatprep.subr.mxu0 0.0
        %327 = vmatpush1.msra.mxu0 0.0
        %328 = vmatprep.subr.mxu0 0.0
        %329 = vmatpush1.msra.mxu0 0.0
        %330 = vmatprep.subr.mxu0 0.0
        %331 = vmatpush1.msra.mxu0 0.0
        %332 = vmatprep.subr.mxu0 0.0
        %333 = vmatpush1.msra.mxu0 0.0
        %334 = vmatprep.subr.mxu0 0.0
        %335 = vmatpush1.msra.mxu0 0.0
        %336 = vmatprep.subr.mxu0 0.0
        %337 = vmatpush1.msra.mxu0 0.0
        %338 = vmatprep.subr.mxu0 0.0
        %339 = vmatpush1.msra.mxu0 0.0
        %340 = vmatprep.mubr.f32.mxu0 0.0
        %v341 = vand.u32 %v243, 4294901760
        %v342 = vsub.f32 %v243, %v341
        %v343 = vand.u32 %v342, 4294901760
        %v344 = vsub.f32 %v342, %v343
        %v345 = vand.u32 %v344, 4294901760
        %346 = vmatmul.mubr.f32.gmra.mrb[0].mxu0 %v345
        %v347 = vpop.f32.mrb[0].mxu0
        %v348 = vadd.f32 0.0, %v347
        %v349 = vpop.f32.mrb[0].mxu0
        %350 = vdwg.mxu0
        %351 = vmatprep.subr.mxu0 0.0
        %v352 = vand.u32 %v244, 4294901760
        %v353 = vsub.f32 %v244, %v352
        %v354 = vand.u32 %v353, 4294901760
        %v355 = vsub.f32 %v353, %v354
        %v356 = vand.u32 %v355, 4294901760
        %357 = vmatpush1.msra.mxu0 %v356
        %358 = vmatprep.subr.mxu0 0.0
        %v359 = vand.u32 %v245, 4294901760
        %v360 = vsub.f32 %v245, %v359
        %v361 = vand.u32 %v360, 4294901760
        %v362 = vsub.f32 %v360, %v361
        %v363 = vand.u32 %v362, 4294901760
        %364 = vmatpush1.msra.mxu0 %v363
        %365 = vmatprep.subr.mxu0 0.0
        %v366 = vand.u32 %v246, 4294901760
        %v367 = vsub.f32 %v246, %v366
        %v368 = vand.u32 %v367, 4294901760
        %v369 = vsub.f32 %v367, %v368
        %v370 = vand.u32 %v369, 4294901760
        %371 = vmatpush1.msra.mxu0 %v370
        %372 = vmatprep.subr.mxu0 0.0
        %v373 = vand.u32 %v247, 4294901760
        %v374 = vsub.f32 %v247, %v373
        %v375 = vand.u32 %v374, 4294901760
        %v376 = vsub.f32 %v374, %v375
        %v377 = vand.u32 %v376, 4294901760
        %378 = vmatpush1.msra.mxu0 %v377
        %379 = vmatprep.subr.mxu0 0.0
        %v380 = vand.u32 %v248, 4294901760
        %v381 = vsub.f32 %v248, %v380
        %v382 = vand.u32 %v381, 4294901760
        %v383 = vsub.f32 %v381, %v382
        %v384 = vand.u32 %v383, 4294901760
        %385 = vmatpush1.msra.mxu0 %v384
        %386 = vmatprep.subr.mxu0 0.0
        %v387 = vand.u32 %v249, 4294901760
        %v388 = vsub.f32 %v249, %v387
        %v389 = vand.u32 %v388, 4294901760
        %v390 = vsub.f32 %v388, %v389
        %v391 = vand.u32 %v390, 4294901760
        %392 = vmatpush1.msra.mxu0 %v391
        %393 = vmatprep.subr.mxu0 0.0
        %v394 = vand.u32 %v250, 4294901760
        %v395 = vsub.f32 %v250, %v394
        %v396 = vand.u32 %v395, 4294901760
        %v397 = vsub.f32 %v395, %v396
        %v398 = vand.u32 %v397, 4294901760
        %399 = vmatpush1.msra.mxu0 %v398
        %400 = vmatprep.subr.mxu0 0.0
        %v401 = vand.u32 %v251, 4294901760
        %v402 = vsub.f32 %v251, %v401
        %v403 = vand.u32 %v402, 4294901760
        %v404 = vsub.f32 %v402, %v403
        %v405 = vand.u32 %v404, 4294901760
        %406 = vmatpush1.msra.mxu0 %v405
        %407 = vmatprep.subr.mxu0 0.0
        %v408 = vand.u32 %v252, 4294901760
        %v409 = vsub.f32 %v252, %v408
        %v410 = vand.u32 %v409, 4294901760
        %v411 = vsub.f32 %v409, %v410
        %v412 = vand.u32 %v411, 4294901760
        %413 = vmatpush1.msra.mxu0 %v412
        %414 = vmatprep.subr.mxu0 0.0
        %v415 = vand.u32 %v253, 4294901760
        %v416 = vsub.f32 %v253, %v415
        %v417 = vand.u32 %v416, 4294901760
        %v418 = vsub.f32 %v416, %v417
        %v419 = vand.u32 %v418, 4294901760
        %420 = vmatpush1.msra.mxu0 %v419
        %421 = vmatprep.subr.mxu0 0.0
        %v422 = vand.u32 %v254, 4294901760
        %v423 = vsub.f32 %v254, %v422
        %v424 = vand.u32 %v423, 4294901760
        %v425 = vsub.f32 %v423, %v424
        %v426 = vand.u32 %v425, 4294901760
        %427 = vmatpush1.msra.mxu0 %v426
        %428 = vmatprep.subr.mxu0 0.0
        %v429 = vand.u32 %v255, 4294901760
        %v430 = vsub.f32 %v255, %v429
        %v431 = vand.u32 %v430, 4294901760
        %v432 = vsub.f32 %v430, %v431
        %v433 = vand.u32 %v432, 4294901760
        %434 = vmatpush1.msra.mxu0 %v433
        %435 = vmatprep.subr.mxu0 0.0
        %v436 = vand.u32 %v256, 4294901760
        %v437 = vsub.f32 %v256, %v436
        %v438 = vand.u32 %v437, 4294901760
        %v439 = vsub.f32 %v437, %v438
        %v440 = vand.u32 %v439, 4294901760
        %441 = vmatpush1.msra.mxu0 %v440
        %442 = vmatprep.subr.mxu0 0.0
        %v443 = vand.u32 %v257, 4294901760
        %v444 = vsub.f32 %v257, %v443
        %v445 = vand.u32 %v444, 4294901760
        %v446 = vsub.f32 %v444, %v445
        %v447 = vand.u32 %v446, 4294901760
        %448 = vmatpush1.msra.mxu0 %v447
        %449 = vmatprep.subr.mxu0 0.0
        %v450 = vand.u32 %v258, 4294901760
        %v451 = vsub.f32 %v258, %v450
        %v452 = vand.u32 %v451, 4294901760
        %v453 = vsub.f32 %v451, %v452
        %v454 = vand.u32 %v453, 4294901760
        %455 = vmatpush1.msra.mxu0 %v454
        %456 = vmatprep.subr.mxu0 0.0
        %v457 = vand.u32 %v259, 4294901760
        %v458 = vsub.f32 %v259, %v457
        %v459 = vand.u32 %v458, 4294901760
        %v460 = vsub.f32 %v458, %v459
        %v461 = vand.u32 %v460, 4294901760
        %462 = vmatpush1.msra.mxu0 %v461
        %463 = vmatprep.subr.mxu0 0.0
        %464 = vmatpush1.msra.mxu0 0.0
        %465 = vmatprep.subr.mxu0 0.0
        %466 = vmatpush1.msra.mxu0 0.0
        %467 = vmatprep.subr.mxu0 0.0
        %468 = vmatpush1.msra.mxu0 0.0
        %469 = vmatprep.subr.mxu0 0.0
        %470 = vmatpush1.msra.mxu0 0.0
        %471 = vmatprep.subr.mxu0 0.0
        %472 = vmatpush1.msra.mxu0 0.0
        %473 = vmatprep.subr.mxu0 0.0
        %474 = vmatpush1.msra.mxu0 0.0
        %475 = vmatprep.subr.mxu0 0.0
        %476 = vmatpush1.msra.mxu0 0.0
        %477 = vmatprep.subr.mxu0 0.0
        %478 = vmatpush1.msra.mxu0 0.0
        %479 = vmatprep.subr.mxu0 0.0
        %480 = vmatpush1.msra.mxu0 0.0
        %481 = vmatprep.subr.mxu0 0.0
        %482 = vmatpush1.msra.mxu0 0.0
        %483 = vmatprep.subr.mxu0 0.0
        %484 = vmatpush1.msra.mxu0 0.0
        %485 = vmatprep.subr.mxu0 0.0
        %486 = vmatpush1.msra.mxu0 0.0
        %487 = vmatprep.subr.mxu0 0.0
        %488 = vmatpush1.msra.mxu0 0.0
        %489 = vmatprep.subr.mxu0 0.0
        %490 = vmatpush1.msra.mxu0 0.0
        %491 = vmatprep.subr.mxu0 0.0
        %492 = vmatpush1.msra.mxu0 0.0
        %493 = vmatprep.subr.mxu0 0.0
        %494 = vmatpush1.msra.mxu0 0.0
        %495 = vmatprep.mubr.f32.mxu0 0.0
        %v496 = vand.u32 %v243, 4294901760
        %497 = vmatmul.mubr.f32.gmra.mrb[0].mxu0 %v496
        %v498 = vpop.f32.mrb[0].mxu0
        %v499 = vadd.f32 %v348, %v498
        %v500 = vpop.f32.mrb[0].mxu0
        %501 = vdwg.mxu0
        %502 = vmatprep.subr.mxu0 0.0
        %v503 = vand.u32 %v244, 4294901760
        %v504 = vsub.f32 %v244, %v503
        %505 = vmatpush1.msra.mxu0 %v504
        %506 = vmatprep.subr.mxu0 0.0
        %v507 = vand.u32 %v245, 4294901760
        %v508 = vsub.f32 %v245, %v507
        %509 = vmatpush1.msra.mxu0 %v508
        %510 = vmatprep.subr.mxu0 0.0
        %v511 = vand.u32 %v246, 4294901760
        %v512 = vsub.f32 %v246, %v511
        %513 = vmatpush1.msra.mxu0 %v512
        %514 = vmatprep.subr.mxu0 0.0
        %v515 = vand.u32 %v247, 4294901760
        %v516 = vsub.f32 %v247, %v515
        %517 = vmatpush1.msra.mxu0 %v516
        %518 = vmatprep.subr.mxu0 0.0
        %v519 = vand.u32 %v248, 4294901760
        %v520 = vsub.f32 %v248, %v519
        %521 = vmatpush1.msra.mxu0 %v520
        %522 = vmatprep.subr.mxu0 0.0
        %v523 = vand.u32 %v249, 4294901760
        %v524 = vsub.f32 %v249, %v523
        %525 = vmatpush1.msra.mxu0 %v524
        %526 = vmatprep.subr.mxu0 0.0
        %v527 = vand.u32 %v250, 4294901760
        %v528 = vsub.f32 %v250, %v527
        %529 = vmatpush1.msra.mxu0 %v528
        %530 = vmatprep.subr.mxu0 0.0
        %v531 = vand.u32 %v251, 4294901760
        %v532 = vsub.f32 %v251, %v531
        %533 = vmatpush1.msra.mxu0 %v532
        %534 = vmatprep.subr.mxu0 0.0
        %v535 = vand.u32 %v252, 4294901760
        %v536 = vsub.f32 %v252, %v535
        %537 = vmatpush1.msra.mxu0 %v536
        %538 = vmatprep.subr.mxu0 0.0
        %v539 = vand.u32 %v253, 4294901760
        %v540 = vsub.f32 %v253, %v539
        %541 = vmatpush1.msra.mxu0 %v540
        %542 = vmatprep.subr.mxu0 0.0
        %v543 = vand.u32 %v254, 4294901760
        %v544 = vsub.f32 %v254, %v543
        %545 = vmatpush1.msra.mxu0 %v544
        %546 = vmatprep.subr.mxu0 0.0
        %v547 = vand.u32 %v255, 4294901760
        %v548 = vsub.f32 %v255, %v547
        %549 = vmatpush1.msra.mxu0 %v548
        %550 = vmatprep.subr.mxu0 0.0
        %v551 = vand.u32 %v256, 4294901760
        %v552 = vsub.f32 %v256, %v551
        %553 = vmatpush1.msra.mxu0 %v552
        %554 = vmatprep.subr.mxu0 0.0
        %v555 = vand.u32 %v257, 4294901760
        %v556 = vsub.f32 %v257, %v555
        %557 = vmatpush1.msra.mxu0 %v556
        %558 = vmatprep.subr.mxu0 0.0
        %v559 = vand.u32 %v258, 4294901760
        %v560 = vsub.f32 %v258, %v559
        %561 = vmatpush1.msra.mxu0 %v560
        %562 = vmatprep.subr.mxu0 0.0
        %v563 = vand.u32 %v259, 4294901760
        %v564 = vsub.f32 %v259, %v563
        %565 = vmatpush1.msra.mxu0 %v564
        %566 = vmatprep.subr.mxu0 0.0
        %567 = vmatpush1.msra.mxu0 0.0
        %568 = vmatprep.subr.mxu0 0.0
        %569 = vmatpush1.msra.mxu0 0.0
        %570 = vmatprep.subr.mxu0 0.0
        %571 = vmatpush1.msra.mxu0 0.0
        %572 = vmatprep.subr.mxu0 0.0
        %573 = vmatpush1.msra.mxu0 0.0
        %574 = vmatprep.subr.mxu0 0.0
        %575 = vmatpush1.msra.mxu0 0.0
        %576 = vmatprep.subr.mxu0 0.0
        %577 = vmatpush1.msra.mxu0 0.0
        %578 = vmatprep.subr.mxu0 0.0
        %579 = vmatpush1.msra.mxu0 0.0
        %580 = vmatprep.subr.mxu0 0.0
        %581 = vmatpush1.msra.mxu0 0.0
        %582 = vmatprep.subr.mxu0 0.0
        %583 = vmatpush1.msra.mxu0 0.0
        %584 = vmatprep.subr.mxu0 0.0
        %585 = vmatpush1.msra.mxu0 0.0
        %586 = vmatprep.subr.mxu0 0.0
        %587 = vmatpush1.msra.mxu0 0.0
        %588 = vmatprep.subr.mxu0 0.0
        %589 = vmatpush1.msra.mxu0 0.0
        %590 = vmatprep.subr.mxu0 0.0
        %591 = vmatpush1.msra.mxu0 0.0
        %592 = vmatprep.subr.mxu0 0.0
        %593 = vmatpush1.msra.mxu0 0.0
        %594 = vmatprep.subr.mxu0 0.0
        %595 = vmatpush1.msra.mxu0 0.0
        %596 = vmatprep.subr.mxu0 0.0
        %597 = vmatpush1.msra.mxu0 0.0
        %598 = vmatprep.mubr.f32.mxu0 0.0
        %v599 = vand.u32 %v243, 4294901760
        %v600 = vsub.f32 %v243, %v599
        %601 = vmatmul.mubr.f32.gmra.mrb[0].mxu0 %v600
        %v602 = vpop.f32.mrb[0].mxu0
        %v603 = vadd.f32 %v499, %v602
        %v604 = vpop.f32.mrb[0].mxu0
        %605 = vdwg.mxu0
        %606 = vmatprep.subr.mxu0 0.0
        %v607 = vand.u32 %v244, 4294901760
        %608 = vmatpush1.msra.mxu0 %v607
        %609 = vmatprep.subr.mxu0 0.0
        %v610 = vand.u32 %v245, 4294901760
        %611 = vmatpush1.msra.mxu0 %v610
        %612 = vmatprep.subr.mxu0 0.0
        %v613 = vand.u32 %v246, 4294901760
        %614 = vmatpush1.msra.mxu0 %v613
        %615 = vmatprep.subr.mxu0 0.0
        %v616 = vand.u32 %v247, 4294901760
        %617 = vmatpush1.msra.mxu0 %v616
        %618 = vmatprep.subr.mxu0 0.0
        %v619 = vand.u32 %v248, 4294901760
        %620 = vmatpush1.msra.mxu0 %v619
        %621 = vmatprep.subr.mxu0 0.0
        %v622 = vand.u32 %v249, 4294901760
        %623 = vmatpush1.msra.mxu0 %v622
        %624 = vmatprep.subr.mxu0 0.0
        %v625 = vand.u32 %v250, 4294901760
        %626 = vmatpush1.msra.mxu0 %v625
        %627 = vmatprep.subr.mxu0 0.0
        %v628 = vand.u32 %v251, 4294901760
        %629 = vmatpush1.msra.mxu0 %v628
        %630 = vmatprep.subr.mxu0 0.0
        %v631 = vand.u32 %v252, 4294901760
        %632 = vmatpush1.msra.mxu0 %v631
        %633 = vmatprep.subr.mxu0 0.0
        %v634 = vand.u32 %v253, 4294901760
        %635 = vmatpush1.msra.mxu0 %v634
        %636 = vmatprep.subr.mxu0 0.0
        %v637 = vand.u32 %v254, 4294901760
        %638 = vmatpush1.msra.mxu0 %v637
        %639 = vmatprep.subr.mxu0 0.0
        %v640 = vand.u32 %v255, 4294901760
        %641 = vmatpush1.msra.mxu0 %v640
        %642 = vmatprep.subr.mxu0 0.0
        %v643 = vand.u32 %v256, 4294901760
        %644 = vmatpush1.msra.mxu0 %v643
        %645 = vmatprep.subr.mxu0 0.0
        %v646 = vand.u32 %v257, 4294901760
        %647 = vmatpush1.msra.mxu0 %v646
        %648 = vmatprep.subr.mxu0 0.0
        %v649 = vand.u32 %v258, 4294901760
        %650 = vmatpush1.msra.mxu0 %v649
        %651 = vmatprep.subr.mxu0 0.0
        %v652 = vand.u32 %v259, 4294901760
        %653 = vmatpush1.msra.mxu0 %v652
        %654 = vmatprep.subr.mxu0 0.0
        %655 = vmatpush1.msra.mxu0 0.0
        %656 = vmatprep.subr.mxu0 0.0
        %657 = vmatpush1.msra.mxu0 0.0
        %658 = vmatprep.subr.mxu0 0.0
        %659 = vmatpush1.msra.mxu0 0.0
        %660 = vmatprep.subr.mxu0 0.0
        %661 = vmatpush1.msra.mxu0 0.0
        %662 = vmatprep.subr.mxu0 0.0
        %663 = vmatpush1.msra.mxu0 0.0
        %664 = vmatprep.subr.mxu0 0.0
        %665 = vmatpush1.msra.mxu0 0.0
        %666 = vmatprep.subr.mxu0 0.0
        %667 = vmatpush1.msra.mxu0 0.0
        %668 = vmatprep.subr.mxu0 0.0
        %669 = vmatpush1.msra.mxu0 0.0
        %670 = vmatprep.subr.mxu0 0.0
        %671 = vmatpush1.msra.mxu0 0.0
        %672 = vmatprep.subr.mxu0 0.0
        %673 = vmatpush1.msra.mxu0 0.0
        %674 = vmatprep.subr.mxu0 0.0
        %675 = vmatpush1.msra.mxu0 0.0
        %676 = vmatprep.subr.mxu0 0.0
        %677 = vmatpush1.msra.mxu0 0.0
        %678 = vmatprep.subr.mxu0 0.0
        %679 = vmatpush1.msra.mxu0 0.0
        %680 = vmatprep.subr.mxu0 0.0
        %681 = vmatpush1.msra.mxu0 0.0
        %682 = vmatprep.subr.mxu0 0.0
        %683 = vmatpush1.msra.mxu0 0.0
        %684 = vmatprep.subr.mxu0 0.0
        %685 = vmatpush1.msra.mxu0 0.0
        %686 = vmatprep.mubr.f32.mxu0 0.0
        %v687 = vand.u32 %v243, 4294901760
        %v688 = vsub.f32 %v243, %v687
        %v689 = vand.u32 %v688, 4294901760
        %690 = vmatmul.mubr.f32.gmra.mrb[0].mxu0 %v689
        %v691 = vpop.f32.mrb[0].mxu0
        %v692 = vadd.f32 %v603, %v691
        %v693 = vpop.f32.mrb[0].mxu0
        %694 = vdwg.mxu0
        %695 = vmatprep.subr.mxu0 0.0
        %v696 = vand.u32 %v244, 4294901760
        %v697 = vsub.f32 %v244, %v696
        %v698 = vand.u32 %v697, 4294901760
        %699 = vmatpush1.msra.mxu0 %v698
        %700 = vmatprep.subr.mxu0 0.0
        %v701 = vand.u32 %v245, 4294901760
        %v702 = vsub.f32 %v245, %v701
        %v703 = vand.u32 %v702, 4294901760
        %704 = vmatpush1.msra.mxu0 %v703
        %705 = vmatprep.subr.mxu0 0.0
        %v706 = vand.u32 %v246, 4294901760
        %v707 = vsub.f32 %v246, %v706
        %v708 = vand.u32 %v707, 4294901760
        %709 = vmatpush1.msra.mxu0 %v708
        %710 = vmatprep.subr.mxu0 0.0
        %v711 = vand.u32 %v247, 4294901760
        %v712 = vsub.f32 %v247, %v711
        %v713 = vand.u32 %v712, 4294901760
        %714 = vmatpush1.msra.mxu0 %v713
        %715 = vmatprep.subr.mxu0 0.0
        %v716 = vand.u32 %v248, 4294901760
        %v717 = vsub.f32 %v248, %v716
        %v718 = vand.u32 %v717, 4294901760
        %719 = vmatpush1.msra.mxu0 %v718
        %720 = vmatprep.subr.mxu0 0.0
        %v721 = vand.u32 %v249, 4294901760
        %v722 = vsub.f32 %v249, %v721
        %v723 = vand.u32 %v722, 4294901760
        %724 = vmatpush1.msra.mxu0 %v723
        %725 = vmatprep.subr.mxu0 0.0
        %v726 = vand.u32 %v250, 4294901760
        %v727 = vsub.f32 %v250, %v726
        %v728 = vand.u32 %v727, 4294901760
        %729 = vmatpush1.msra.mxu0 %v728
        %730 = vmatprep.subr.mxu0 0.0
        %v731 = vand.u32 %v251, 4294901760
        %v732 = vsub.f32 %v251, %v731
        %v733 = vand.u32 %v732, 4294901760
        %734 = vmatpush1.msra.mxu0 %v733
        %735 = vmatprep.subr.mxu0 0.0
        %v736 = vand.u32 %v252, 4294901760
        %v737 = vsub.f32 %v252, %v736
        %v738 = vand.u32 %v737, 4294901760
        %739 = vmatpush1.msra.mxu0 %v738
        %740 = vmatprep.subr.mxu0 0.0
        %v741 = vand.u32 %v253, 4294901760
        %v742 = vsub.f32 %v253, %v741
        %v743 = vand.u32 %v742, 4294901760
        %744 = vmatpush1.msra.mxu0 %v743
        %745 = vmatprep.subr.mxu0 0.0
        %v746 = vand.u32 %v254, 4294901760
        %v747 = vsub.f32 %v254, %v746
        %v748 = vand.u32 %v747, 4294901760
        %749 = vmatpush1.msra.mxu0 %v748
        %750 = vmatprep.subr.mxu0 0.0
        %v751 = vand.u32 %v255, 4294901760
        %v752 = vsub.f32 %v255, %v751
        %v753 = vand.u32 %v752, 4294901760
        %754 = vmatpush1.msra.mxu0 %v753
        %755 = vmatprep.subr.mxu0 0.0
        %v756 = vand.u32 %v256, 4294901760
        %v757 = vsub.f32 %v256, %v756
        %v758 = vand.u32 %v757, 4294901760
        %759 = vmatpush1.msra.mxu0 %v758
        %760 = vmatprep.subr.mxu0 0.0
        %v761 = vand.u32 %v257, 4294901760
        %v762 = vsub.f32 %v257, %v761
        %v763 = vand.u32 %v762, 4294901760
        %764 = vmatpush1.msra.mxu0 %v763
        %765 = vmatprep.subr.mxu0 0.0
        %v766 = vand.u32 %v258, 4294901760
        %v767 = vsub.f32 %v258, %v766
        %v768 = vand.u32 %v767, 4294901760
        %769 = vmatpush1.msra.mxu0 %v768
        %770 = vmatprep.subr.mxu0 0.0
        %v771 = vand.u32 %v259, 4294901760
        %v772 = vsub.f32 %v259, %v771
        %v773 = vand.u32 %v772, 4294901760
        %774 = vmatpush1.msra.mxu0 %v773
        %775 = vmatprep.subr.mxu0 0.0
        %776 = vmatpush1.msra.mxu0 0.0
        %777 = vmatprep.subr.mxu0 0.0
        %778 = vmatpush1.msra.mxu0 0.0
        %779 = vmatprep.subr.mxu0 0.0
        %780 = vmatpush1.msra.mxu0 0.0
        %781 = vmatprep.subr.mxu0 0.0
        %782 = vmatpush1.msra.mxu0 0.0
        %783 = vmatprep.subr.mxu0 0.0
        %784 = vmatpush1.msra.mxu0 0.0
        %785 = vmatprep.subr.mxu0 0.0
        %786 = vmatpush1.msra.mxu0 0.0
        %787 = vmatprep.subr.mxu0 0.0
        %788 = vmatpush1.msra.mxu0 0.0
        %789 = vmatprep.subr.mxu0 0.0
        %790 = vmatpush1.msra.mxu0 0.0
        %791 = vmatprep.subr.mxu0 0.0
        %792 = vmatpush1.msra.mxu0 0.0
        %793 = vmatprep.subr.mxu0 0.0
        %794 = vmatpush1.msra.mxu0 0.0
        %795 = vmatprep.subr.mxu0 0.0
        %796 = vmatpush1.msra.mxu0 0.0
        %797 = vmatprep.subr.mxu0 0.0
        %798 = vmatpush1.msra.mxu0 0.0
        %799 = vmatprep.subr.mxu0 0.0
        %800 = vmatpush1.msra.mxu0 0.0
        %801 = vmatprep.subr.mxu0 0.0
        %802 = vmatpush1.msra.mxu0 0.0
        %803 = vmatprep.subr.mxu0 0.0
        %804 = vmatpush1.msra.mxu0 0.0
        %805 = vmatprep.subr.mxu0 0.0
        %806 = vmatpush1.msra.mxu0 0.0
        %807 = vmatprep.mubr.f32.mxu0 0.0
        %v808 = vand.u32 %v243, 4294901760
        %809 = vmatmul.mubr.f32.gmra.mrb[0].mxu0 %v808
        %v810 = vpop.f32.mrb[0].mxu0
        %v811 = vadd.f32 %v692, %v810
        %v812 = vpop.f32.mrb[0].mxu0
        %813 = vdwg.mxu0
        %814 = vmatprep.subr.mxu0 0.0
        %v815 = vand.u32 %v244, 4294901760
        %816 = vmatpush1.msra.mxu0 %v815
        %817 = vmatprep.subr.mxu0 0.0
        %v818 = vand.u32 %v245, 4294901760
        %819 = vmatpush1.msra.mxu0 %v818
        %820 = vmatprep.subr.mxu0 0.0
        %v821 = vand.u32 %v246, 4294901760
        %822 = vmatpush1.msra.mxu0 %v821
        %823 = vmatprep.subr.mxu0 0.0
        %v824 = vand.u32 %v247, 4294901760
        %825 = vmatpush1.msra.mxu0 %v824
        %826 = vmatprep.subr.mxu0 0.0
        %v827 = vand.u32 %v248, 4294901760
        %828 = vmatpush1.msra.mxu0 %v827
        %829 = vmatprep.subr.mxu0 0.0
        %v830 = vand.u32 %v249, 4294901760
        %831 = vmatpush1.msra.mxu0 %v830
        %832 = vmatprep.subr.mxu0 0.0
        %v833 = vand.u32 %v250, 4294901760
        %834 = vmatpush1.msra.mxu0 %v833
        %835 = vmatprep.subr.mxu0 0.0
        %v836 = vand.u32 %v251, 4294901760
        %837 = vmatpush1.msra.mxu0 %v836
        %838 = vmatprep.subr.mxu0 0.0
        %v839 = vand.u32 %v252, 4294901760
        %840 = vmatpush1.msra.mxu0 %v839
        %841 = vmatprep.subr.mxu0 0.0
        %v842 = vand.u32 %v253, 4294901760
        %843 = vmatpush1.msra.mxu0 %v842
        %844 = vmatprep.subr.mxu0 0.0
        %v845 = vand.u32 %v254, 4294901760
        %846 = vmatpush1.msra.mxu0 %v845
        %847 = vmatprep.subr.mxu0 0.0
        %v848 = vand.u32 %v255, 4294901760
        %849 = vmatpush1.msra.mxu0 %v848
        %850 = vmatprep.subr.mxu0 0.0
        %v851 = vand.u32 %v256, 4294901760
        %852 = vmatpush1.msra.mxu0 %v851
        %853 = vmatprep.subr.mxu0 0.0
        %v854 = vand.u32 %v257, 4294901760
        %855 = vmatpush1.msra.mxu0 %v854
        %856 = vmatprep.subr.mxu0 0.0
        %v857 = vand.u32 %v258, 4294901760
        %858 = vmatpush1.msra.mxu0 %v857
        %859 = vmatprep.subr.mxu0 0.0
        %v860 = vand.u32 %v259, 4294901760
        %861 = vmatpush1.msra.mxu0 %v860
        %862 = vmatprep.subr.mxu0 0.0
        %863 = vmatpush1.msra.mxu0 0.0
        %864 = vmatprep.subr.mxu0 0.0
        %865 = vmatpush1.msra.mxu0 0.0
        %866 = vmatprep.subr.mxu0 0.0
        %867 = vmatpush1.msra.mxu0 0.0
        %868 = vmatprep.subr.mxu0 0.0
        %869 = vmatpush1.msra.mxu0 0.0
        %870 = vmatprep.subr.mxu0 0.0
        %871 = vmatpush1.msra.mxu0 0.0
        %872 = vmatprep.subr.mxu0 0.0
        %873 = vmatpush1.msra.mxu0 0.0
        %874 = vmatprep.subr.mxu0 0.0
        %875 = vmatpush1.msra.mxu0 0.0
        %876 = vmatprep.subr.mxu0 0.0
        %877 = vmatpush1.msra.mxu0 0.0
        %878 = vmatprep.subr.mxu0 0.0
        %879 = vmatpush1.msra.mxu0 0.0
        %880 = vmatprep.subr.mxu0 0.0
        %881 = vmatpush1.msra.mxu0 0.0
        %882 = vmatprep.subr.mxu0 0.0
        %883 = vmatpush1.msra.mxu0 0.0
        %884 = vmatprep.subr.mxu0 0.0
        %885 = vmatpush1.msra.mxu0 0.0
        %886 = vmatprep.subr.mxu0 0.0
        %887 = vmatpush1.msra.mxu0 0.0
        %888 = vmatprep.subr.mxu0 0.0
        %889 = vmatpush1.msra.mxu0 0.0
        %890 = vmatprep.subr.mxu0 0.0
        %891 = vmatpush1.msra.mxu0 0.0
        %892 = vmatprep.subr.mxu0 0.0
        %893 = vmatpush1.msra.mxu0 0.0
        %894 = vmatprep.mubr.f32.mxu0 0.0
        %v895 = vand.u32 %v243, 4294901760
        %896 = vmatmul.mubr.f32.gmra.mrb[0].mxu0 %v895
        %v897 = vpop.f32.mrb[0].mxu0
        %v898 = vadd.f32 %v811, %v897
        %v899 = vpop.f32.mrb[0].mxu0
        %900 = vdwg.mxu0
        %901 = vst [vmem:[%s241] sm:$0xff] %v898
        %s902 = sand.u32 %s120, 1
        %s903 = scalar_lea.sflag [#allocation4], %s902
        %s904 = sand.u32 %s120, 1
        %s905 = smul.addr %s904, 8
        %s906 = scalar_lea.vmem [#allocation7], %s905
        // Predicated region
        $region37: #{tpu_custom_call.1} parent=27 // pred_check
          %p907 = pneg %p130
        $region38: #{tpu_custom_call.1} parent=27 // pred_check_branch
          %909 = sbr.rel (%p907) target = $region40
        $region39: #{tpu_custom_call.1} parent=27 // pred_region
          %s911 = ssub.s32 128, 128
          %912 = vsyncadd %s903, %s911
          %s913 = sadd.s32 %s30, %s29
          %s914 = sadd.s32 %s913, %s28
          %s915 = smul.addr %s914, 128
          %s916 = scalar_lea.hbm %s2, %s915
          %s918 = sshll.u32 %s906, 4
          %s919 = int_to_ptr.vmem [resolvable:$true] %s918
          %921 = dma.vmem_to_hbm [thread:$0]  %s919, 128, %s916, %s903
        $region40: #{tpu_custom_call.1} parent=27 // pred_fallthru
          _
      $region28: #{tpu_custom_call.1} parent=5 // pred_fallthru
        _
      %p922 = scmp.le.s32.totalorder 2, %s17
      // Predicated region
      $region41: #{tpu_custom_call.1} parent=5 // pred_check
        %p923 = pneg %p922
      $region42: #{tpu_custom_call.1} parent=5 // pred_check_branch
        %925 = sbr.rel (%p923) target = $region44
      $region43: #{tpu_custom_call.1} parent=5 // pred_region
        %s926 = ssub.s32 %s17, 2
        // Predicated region
        $region45: #{tpu_custom_call.1} parent=43 // pred_check
          %p927 = pneg %p136
        $region46: #{tpu_custom_call.1} parent=43 // pred_check_branch
          %929 = sbr.rel (%p927) target = $region48
        $region47: #{tpu_custom_call.1} parent=43 // pred_region
          %s930 = sand.u32 %s121, 1
          %s931 = scalar_lea.sflag [#allocation4], %s930
          %s932 = sand.u32 %s121, 1
          %s933 = smul.addr %s932, 8
          %s934 = scalar_lea.vmem [#allocation7], %s933
          %935 = dma.done %s931, 128
        $region48: #{tpu_custom_call.1} parent=43 // pred_fallthru
          _
      $region44: #{tpu_custom_call.1} parent=5 // pred_fallthru
        _
    $region6: #{tpu_custom_call.1} parent=1 // loop_footer
      %s21 = sadd.s32 1, %s17
    $region7: #{tpu_custom_call.1} parent=1 // loop_footer_branch
      %16 = sbr.rel target = $region3
    $region8: #{tpu_custom_call.1} parent=1 // loop_exit
      _
    %936 = vsyncpa [#allocation3], 1
    %s937 = scalar_lea.sflag [#allocation3], 1
    %938 = vsyncpa %s937, 1
    %939 = vsyncpa [#allocation6], 1
    %s940 = scalar_lea.sflag [#allocation6], 1
    %941 = vsyncpa %s940, 1
    %942 = vsyncpa [#allocation4], 1
    %s943 = scalar_lea.sflag [#allocation4], 1
    %944 = vsyncpa %s943, 1

</llo_original>
